<compile_context>
chip_gen: v5e
topology: v5e:2x2
jax: 0.10.0
libtpu: 0.0.40
codegen_flags: <defaults>
</compile_context>

<pallas_src>
import math

import jax
import jax.numpy as jnp
from jax import lax
from jax.experimental import pallas as pl
from jax.experimental.pallas import tpu as pltpu

BN_EPS = 1e-5


def conv_stats_kernel(x_ref, w_ref, y_ref, stats_ref):
    # x_ref    : (TR, K)        bf16 im2col tile
    # w_ref    : (K, Cout_pad)  bf16 conv weights (tap-major, channel-minor rows)
    # y_ref    : (TR, Cout_pad) f32 pre-BN conv output tile
    # stats_ref: (2, Cout_pad)  f32 resident accumulator: [sum(y); sum(y*y)]
    y = jnp.dot(x_ref[...], w_ref[...], preferred_element_type=jnp.float32)
    y_ref[...] = y

    @pl.when(pl.program_id(0) == 0)
    def _init():
        stats_ref[...] = jnp.zeros_like(stats_ref)

    s = jnp.sum(y, axis=0, keepdims=True)
    ss = jnp.sum(y * y, axis=0, keepdims=True)
    stats_ref[...] += jnp.concatenate([s, ss], axis=0)


def bn_relu_kernel(y_ref, scale_ref, shift_ref, o_ref):
    # y_ref: (TR, Cout_pad) f32; scale/shift: (1, Cout_pad) f32
    o_ref[...] = jnp.maximum(
        y_ref[...] * scale_ref[...] + shift_ref[...], 0.0).astype(o_ref.dtype)


def conv_block_cbr(x_nchw, w_oihw, b, gamma, beta, *, tile_rows=1024):
    """Forward of ConvBlock_CBR. x_nchw: (N, Cin, H, W) -> (N, Cout, H, W) float32."""
    del b  # Conv bias cancels exactly under training-mode BatchNorm (mean subtraction).

    N, Cin, H, W = x_nchw.shape
    Cout = w_oihw.shape[0]
    Cout_pad = ((Cout + 127) // 128) * 128
    K = 9 * Cin
    NHW = N * H * W

    # --- glue: im2col in bf16 (halves HBM traffic of the 9x-inflated operand) ---
    x_nhwc = jnp.transpose(x_nchw, (0, 2, 3, 1)).astype(jnp.bfloat16)
    x_pad = jnp.pad(x_nhwc, ((0, 0), (1, 1), (1, 1), (0, 0)))
    patches = [x_pad[:, dy:dy + H, dx:dx + W, :]
               for dy in range(3) for dx in range(3)]
    x_col = jnp.concatenate(patches, axis=-1).reshape(NHW, K)

    # Row tile: multiple of 8 sublanes, no larger than (padded) NHW.
    TR = max(8, (int(tile_rows) // 8) * 8)
    TR = min(TR, ((NHW + 7) // 8) * 8)
    NHW_pad = ((NHW + TR - 1) // TR) * TR
    if NHW_pad != NHW:
        # Zero rows contribute 0 to sum/sumsq, so the stats stay exact.
        x_col = jnp.pad(x_col, ((0, NHW_pad - NHW), (0, 0)))
    num_tiles = NHW_pad // TR

    # W_col[(dy*3+dx)*Cin + ci, co] = w[co, ci, dy, dx]; pad Cout to 128 lanes.
    w_col = jnp.transpose(w_oihw, (2, 3, 1, 0)).reshape(K, Cout).astype(jnp.bfloat16)
    if Cout_pad != Cout:
        w_col = jnp.pad(w_col, ((0, 0), (0, Cout_pad - Cout)))

    # ---------------- pass 1: conv + per-channel sum / sumsq ----------------
    y_flat, stats = pl.pallas_call(
        conv_stats_kernel,
        out_shape=(jax.ShapeDtypeStruct((NHW_pad, Cout_pad), jnp.float32),
                   jax.ShapeDtypeStruct((2, Cout_pad), jnp.float32)),
        grid_spec=pl.GridSpec(
            grid=(num_tiles,),
            in_specs=[
                pl.BlockSpec((TR, K), lambda i: (i, 0)),
                pl.BlockSpec((K, Cout_pad), lambda i: (0, 0)),
            ],
            out_specs=(
                pl.BlockSpec((TR, Cout_pad), lambda i: (i, 0)),
                pl.BlockSpec((2, Cout_pad), lambda i: (0, 0)),  # resident accumulator
            ),
        ),
        compiler_params=pltpu.CompilerParams(
            dimension_semantics=("arbitrary",)),
        cost_estimate=pl.CostEstimate(
            flops=2 * NHW_pad * K * Cout_pad,
            transcendentals=0,
            bytes_accessed=(NHW_pad * K * 2 + K * Cout_pad * 2
                            + NHW_pad * Cout_pad * 4 + 2 * Cout_pad * 4)),
    )(x_col, w_col)

    # --------- tiny per-channel glue: mean/var -> scale & shift -------------
    inv_n = 1.0 / float(NHW)          # real element count (padding rows are zero)
    mean = stats[0:1, :] * inv_n
    ex2 = stats[1:2, :] * inv_n
    var = jnp.maximum(ex2 - mean * mean, 0.0)
    inv_std = lax.rsqrt(var + BN_EPS)
    gamma_pad = jnp.pad(gamma.astype(jnp.float32),
                        (0, Cout_pad - Cout)).reshape(1, Cout_pad)
    beta_pad = jnp.pad(beta.astype(jnp.float32),
                       (0, Cout_pad - Cout)).reshape(1, Cout_pad)
    scale = gamma_pad * inv_std
    shift = beta_pad - mean * scale

    # ---------------- pass 2: normalize + ReLU (rows independent) -----------
    out_flat = pl.pallas_call(
        bn_relu_kernel,
        out_shape=jax.ShapeDtypeStruct((NHW_pad, Cout_pad), jnp.float32),
        grid_spec=pl.GridSpec(
            grid=(num_tiles,),
            in_specs=[
                pl.BlockSpec((TR, Cout_pad), lambda i: (i, 0)),
                pl.BlockSpec((1, Cout_pad), lambda i: (0, 0)),
                pl.BlockSpec((1, Cout_pad), lambda i: (0, 0)),
            ],
            out_specs=pl.BlockSpec((TR, Cout_pad), lambda i: (i, 0)),
        ),
        compiler_params=pltpu.CompilerParams(
            dimension_semantics=("parallel",)),
        cost_estimate=pl.CostEstimate(
            flops=2 * NHW_pad * Cout_pad,
            transcendentals=0,
            bytes_accessed=2 * NHW_pad * Cout_pad * 4 + 2 * Cout_pad * 4),
    )(y_flat, scale, shift)

    out = out_flat[:NHW, :Cout].reshape(N, H, W, Cout)
    return jnp.transpose(out, (0, 3, 1, 2))  # back to NCHW


def reference_conv_block_cbr(x_nchw, w_oihw, b, gamma, beta):
    """Plain-JAX reference matching the PyTorch module (training-mode BN)."""
    y = lax.conv_general_dilated(
        x_nchw.astype(jnp.float32), w_oihw.astype(jnp.float32),
        window_strides=(1, 1), padding=((1, 1), (1, 1)),
        dimension_numbers=("NCHW", "OIHW", "NCHW"))
    y = y + b.reshape(1, -1, 1, 1)
    mean = jnp.mean(y, axis=(0, 2, 3), keepdims=True)
    var = jnp.mean((y - mean) ** 2, axis=(0, 2, 3), keepdims=True)
    y = (y - mean) * lax.rsqrt(var + BN_EPS)
    y = y * gamma.reshape(1, -1, 1, 1) + beta.reshape(1, -1, 1, 1)
    return jnp.maximum(y, 0.0)


if __name__ == "__main__":
    # Small shapes consistent with the module: Conv2d(in_dim=4, hid_dim=32, k=3, pad=1)
    N, Cin, H, W = 2, 4, 16, 16
    Cout = 32

    key = jax.random.PRNGKey(0)
    kx, kw, kb = jax.random.split(key, 3)

    x = jax.random.normal(kx, (N, Cin, H, W), dtype=jnp.float32)

    # layerInitializer: conv weight ~ N(0, sqrt(2 / (k*k*out_channels)))
    w_std = math.sqrt(2.0 / float(3 * 3 * Cout))
    w = w_std * jax.random.normal(kw, (Cout, Cin, 3, 3), dtype=jnp.float32)
    # Conv2d default bias init: U(-1/sqrt(fan_in), 1/sqrt(fan_in)), fan_in = Cin*k*k.
    # (The bias is mathematically cancelled by training-mode BN; kept for API fidelity.)
    bound = 1.0 / math.sqrt(Cin * 3 * 3)
    b = jax.random.uniform(kb, (Cout,), minval=-bound, maxval=bound,
                           dtype=jnp.float32)
    # BatchNorm2d: weight=1, bias=0 (per layerInitializer)
    gamma = jnp.ones((Cout,), dtype=jnp.float32)
    beta = jnp.zeros((Cout,), dtype=jnp.float32)

    fwd = jax.jit(conv_block_cbr, static_argnames=("tile_rows",))
    # tile_rows=128 -> 4 row tiles at this toy shape, exercising the pipelined
    # accumulator path. The default (1024) targets realistic shapes.
    out = jax.block_until_ready(fwd(x, w, b, gamma, beta, tile_rows=128))
    assert out.shape == (N, Cout, H, W), out.shape

    # Tight check: reference fed the same bf16-quantized conv operands (isolates
    # kernel correctness from the intentional bf16 input quantization).
    x_q = x.astype(jnp.bfloat16).astype(jnp.float32)
    w_q = w.astype(jnp.bfloat16).astype(jnp.float32)
    ref_q = jax.block_until_ready(reference_conv_block_cbr(x_q, w_q, b, gamma, beta))
    assert jnp.allclose(out, ref_q, rtol=1e-3, atol=1e-3), (
        float(jnp.max(jnp.abs(out - ref_q))))

    # Loose check vs the exact f32 reference (bf16 matmul operands in the kernel).
    ref = jax.block_until_ready(reference_conv_block_cbr(x, w, b, gamma, beta))
    assert jnp.allclose(out, ref, rtol=5e-2, atol=5e-2), (
        float(jnp.max(jnp.abs(out - ref))))

    print("KERNEL_OK")
</pallas_src>

<mosaic_0001>
module attributes {stable_mosaic.version = 11 : i64} {
  func.func @bn_relu_kernel(%arg0: i32, %arg1: memref<128x128xf32, #tpu.memory_space<vmem>>, %arg2: memref<1x128xf32, #tpu.memory_space<vmem>>, %arg3: memref<1x128xf32, #tpu.memory_space<vmem>>, %arg4: memref<128x128xf32, #tpu.memory_space<vmem>>) attributes {dimension_semantics = [#tpu.dimension_semantics<parallel>], iteration_bounds = array<i64: 4>, scalar_prefetch = 0 : i64, scratch_operands = 0 : i64, tpu.core_type = #tpu.core_type<tc>, window_params = [{transform_indices = @transform_0, window_bounds = array<i64: 128, 128>}, {pipeline_mode = #tpu.pipeline_mode<synchronous>, transform_indices = @transform_1, window_bounds = array<i64: 1, 128>}, {pipeline_mode = #tpu.pipeline_mode<synchronous>, transform_indices = @transform_2, window_bounds = array<i64: 1, 128>}, {transform_indices = @transform_3, window_bounds = array<i64: 128, 128>}]} {
    %c0 = arith.constant 0 : index
    %c0_0 = arith.constant 0 : index
    %0 = vector.load %arg1[%c0, %c0_0] : memref<128x128xf32, #tpu.memory_space<vmem>>, vector<128x128xf32>
    %c0_1 = arith.constant 0 : index
    %c0_2 = arith.constant 0 : index
    %1 = vector.load %arg2[%c0_1, %c0_2] : memref<1x128xf32, #tpu.memory_space<vmem>>, vector<1x128xf32>
    %2 = vector.broadcast %1 : vector<1x128xf32> to vector<128x128xf32>
    %3 = arith.mulf %0, %2 : vector<128x128xf32>
    %c0_3 = arith.constant 0 : index
    %c0_4 = arith.constant 0 : index
    %4 = vector.load %arg3[%c0_3, %c0_4] : memref<1x128xf32, #tpu.memory_space<vmem>>, vector<1x128xf32>
    %5 = vector.broadcast %4 : vector<1x128xf32> to vector<128x128xf32>
    %6 = arith.addf %3, %5 : vector<128x128xf32>
    %cst = arith.constant 0.000000e+00 : f32
    %7 = vector.broadcast %cst : f32 to vector<128x128xf32>
    %8 = arith.maximumf %6, %7 : vector<128x128xf32>
    %c0_5 = arith.constant 0 : index
    %c0_6 = arith.constant 0 : index
    %9 = vector.load %arg4[%c0_5, %c0_6] : memref<128x128xf32, #tpu.memory_space<vmem>>, vector<128x128xf32>
    tpu.vector_store %arg4[%c0_5, %c0_6], %8 {strides = array<i32>} : memref<128x128xf32, #tpu.memory_space<vmem>>, vector<128x128xf32>,
    return
  }
  func.func @transform_0(%arg0: i32) -> (i32, i32) {
    %c0_i32 = arith.constant 0 : i32
    %c0_i32_0 = arith.constant 0 : i32
    return %arg0, %c0_i32 : i32, i32
  }
  func.func @transform_1(%arg0: i32) -> (i32, i32) {
    %c0_i32 = arith.constant 0 : i32
    %c0_i32_0 = arith.constant 0 : i32
    %c0_i32_1 = arith.constant 0 : i32
    return %c0_i32, %c0_i32_0 : i32, i32
  }
  func.func @transform_2(%arg0: i32) -> (i32, i32) {
    %c0_i32 = arith.constant 0 : i32
    %c0_i32_0 = arith.constant 0 : i32
    %c0_i32_1 = arith.constant 0 : i32
    return %c0_i32, %c0_i32_0 : i32, i32
  }
  func.func @transform_3(%arg0: i32) -> (i32, i32) {
    %c0_i32 = arith.constant 0 : i32
    %c0_i32_0 = arith.constant 0 : i32
    return %arg0, %c0_i32 : i32, i32
  }
}

module attributes {stable_mosaic.version = 11 : i64} {
  func.func @conv_stats_kernel(%arg0: i32, %arg1: memref<128x36xbf16, #tpu.memory_space<vmem>>, %arg2: memref<36x128xbf16, #tpu.memory_space<vmem>>, %arg3: memref<128x128xf32, #tpu.memory_space<vmem>>, %arg4: memref<2x128xf32, #tpu.memory_space<vmem>>) attributes {dimension_semantics = [#tpu.dimension_semantics<arbitrary>], iteration_bounds = array<i64: 4>, scalar_prefetch = 0 : i64, scratch_operands = 0 : i64, tpu.core_type = #tpu.core_type<tc>, window_params = [{transform_indices = @transform_0, window_bounds = array<i64: 128, 36>}, {pipeline_mode = #tpu.pipeline_mode<synchronous>, transform_indices = @transform_1, window_bounds = array<i64: 36, 128>}, {transform_indices = @transform_2, window_bounds = array<i64: 128, 128>}, {pipeline_mode = #tpu.pipeline_mode<synchronous>, transform_indices = @transform_3, window_bounds = array<i64: 2, 128>}]} {
    %c0 = arith.constant 0 : index
    %c0_0 = arith.constant 0 : index
    %0 = vector.load %arg1[%c0, %c0_0] : memref<128x36xbf16, #tpu.memory_space<vmem>>, vector<128x36xbf16>
    %c0_1 = arith.constant 0 : index
    %c0_2 = arith.constant 0 : index
    %1 = vector.load %arg2[%c0_1, %c0_2] : memref<36x128xbf16, #tpu.memory_space<vmem>>, vector<36x128xbf16>
    %cst = arith.constant dense<0.000000e+00> : vector<128x128xf32>
    %2 = tpu.matmul %0, %1, %cst {dimension_numbers = #tpu.dot_dimension_numbers<[1], [0], [0], [1], [0, 0, 1, 1], [], []>} : vector<128x36xbf16>, vector<36x128xbf16>, vector<128x128xf32> -> vector<128x128xf32>
    %c0_3 = arith.constant 0 : index
    %c0_4 = arith.constant 0 : index
    %3 = vector.load %arg3[%c0_3, %c0_4] : memref<128x128xf32, #tpu.memory_space<vmem>>, vector<128x128xf32>
    tpu.vector_store %arg3[%c0_3, %c0_4], %2 {strides = array<i32>} : memref<128x128xf32, #tpu.memory_space<vmem>>, vector<128x128xf32>,
    %c0_i32 = arith.constant 0 : i32
    %4 = arith.cmpi eq, %arg0, %c0_i32 : i32
    %5 = arith.extui %4 : i1 to i32
    %c0_i32_5 = arith.constant 0 : i32
    %6 = arith.cmpi ne, %5, %c0_i32_5 : i32
    scf.if %6 {
      %cst_12 = arith.constant 0.000000e+00 : f32
      %16 = vector.broadcast %cst_12 : f32 to vector<2x128xf32>
      %c0_13 = arith.constant 0 : index
      %c0_14 = arith.constant 0 : index
      %17 = vector.load %arg4[%c0_13, %c0_14] : memref<2x128xf32, #tpu.memory_space<vmem>>, vector<2x128xf32>
      tpu.vector_store %arg4[%c0_13, %c0_14], %16 {strides = array<i32>} : memref<2x128xf32, #tpu.memory_space<vmem>>, vector<2x128xf32>,
    } else {
    }
    %cst_6 = arith.constant dense<0.000000e+00> : vector<128xf32>
    %7 = vector.multi_reduction <add>, %2, %cst_6 [0] : vector<128x128xf32> to vector<128xf32>
    %8 = vector.shape_cast %7 : vector<128xf32> to vector<1x128xf32>
    %9 = arith.mulf %2, %2 : vector<128x128xf32>
    %cst_7 = arith.constant dense<0.000000e+00> : vector<128xf32>
    %10 = vector.multi_reduction <add>, %9, %cst_7 [0] : vector<128x128xf32> to vector<128xf32>
    %11 = vector.shape_cast %10 : vector<128xf32> to vector<1x128xf32>
    %c0_8 = arith.constant 0 : index
    %c0_9 = arith.constant 0 : index
    %12 = vector.load %arg4[%c0_8, %c0_9] : memref<2x128xf32, #tpu.memory_space<vmem>>, vector<2x128xf32>
    %13 = tpu.concatenate %8, %11 in 0 : vector<1x128xf32>, vector<1x128xf32> -> vector<2x128xf32>
    %14 = arith.addf %12, %13 : vector<2x128xf32>
    %c0_10 = arith.constant 0 : index
    %c0_11 = arith.constant 0 : index
    %15 = vector.load %arg4[%c0_10, %c0_11] : memref<2x128xf32, #tpu.memory_space<vmem>>, vector<2x128xf32>
    tpu.vector_store %arg4[%c0_10, %c0_11], %14 {strides = array<i32>} : memref<2x128xf32, #tpu.memory_space<vmem>>, vector<2x128xf32>,
    return
  }
  func.func @transform_0(%arg0: i32) -> (i32, i32) {
    %c0_i32 = arith.constant 0 : i32
    %c0_i32_0 = arith.constant 0 : i32
    return %arg0, %c0_i32 : i32, i32
  }
  func.func @transform_1(%arg0: i32) -> (i32, i32) {
    %c0_i32 = arith.constant 0 : i32
    %c0_i32_0 = arith.constant 0 : i32
    %c0_i32_1 = arith.constant 0 : i32
    return %c0_i32, %c0_i32_0 : i32, i32
  }
  func.func @transform_2(%arg0: i32) -> (i32, i32) {
    %c0_i32 = arith.constant 0 : i32
    %c0_i32_0 = arith.constant 0 : i32
    return %arg0, %c0_i32 : i32, i32
  }
  func.func @transform_3(%arg0: i32) -> (i32, i32) {
    %c0_i32 = arith.constant 0 : i32
    %c0_i32_0 = arith.constant 0 : i32
    %c0_i32_1 = arith.constant 0 : i32
    return %c0_i32, %c0_i32_0 : i32, i32
  }
}

</mosaic_0001>

<llo_original>
// kernel: conv_block_cbr.3
$region0: #{conv_block_cbr.3}
  #allocation0 [shape = 'u32[]', space=smem, size = 0x4, offset = 0x4, fixed_abs, tag = 'smem constant byte address 0x4 - core index']
  #allocation1 [shape = 'u32[72,128]{1,0:T(1,128)}', space=vmem, size = 0x9000, scoped, tag = 'internal scratch']
  %s0 = inlined_call_operand.vmem [shape: f32[512,128], index: 0, kind: input, shape index: {}]
  %s1 = inlined_call_operand.vmem [shape: f32[1,128], index: 1, kind: input, shape index: {}]
  %s2 = inlined_call_operand.vmem [shape: f32[1,128], index: 2, kind: input, shape index: {}]
  %s3 = inlined_call_operand.hbm [shape: f32[512,128], index: 3, kind: output, shape index: {}]
  %s4 = sld [smem:[#allocation0]]
  $region45: #{conv_block_cbr.3} parent=0
    _
  %s6 = ssub.s32 1, %s4
  %s7 = scalar_select 0, %s6, %s4
  $region1: #{conv_block_cbr.3} parent=0
    #allocation2 [shape = 'u8[131072]{0}', space=vmem, size = 0x20000, scoped, tag = 'output window, operand 0']
    #allocation3 [shape = 's32[2]{0}', space=sflag, size = 0x8, scoped, tag = 'scoped memory for conv_block_cbr.3']
    %8 = vsyncpa [#allocation3], 0
    %s9 = scalar_lea.sflag [#allocation3], 1
    %10 = vsyncpa %s9, 0
    loop: start=0, step=1, limit=6
    $region2: #{conv_block_cbr.3} parent=1 // loop_pre_header
      _
    $region3: #{conv_block_cbr.3} parent=1 // loop_header
      %s12 = sphi 0, %s16
      %p13 = scmp.ge.s32.totalorder %s12, 6
      %s22 = sphi 0, %s24
      %s25 = sphi 0, %s22
      %s26 = sphi 0, %s25
      %s42 = sphi 0, %s26
      %s46 = sphi 0, %s46
      %s48 = sphi 0, %s46
      %s49 = sphi 0, %s48
      %s63 = sphi 0, %s49
      %s67 = sphi 0, %s67
      %s69 = sphi 0, %s67
      %s70 = sphi 0, %s69
      %s84 = sphi 0, %s70
      %s90 = sphi 0, %s92
      %s93 = sphi 0, %s90
      %s94 = sphi 0, %s93
      %s110 = sphi 0, %s94
    $region4: #{conv_block_cbr.3} parent=1 // loop_header_branch
      %15 = sbr.rel (%p13) target = $region8
    $region5: #{conv_block_cbr.3} parent=1 // loop_body
      %s17 = ssub.s32 %s12, 1
      %s18 = ssub.s32 %s12, 2
      %s19 = sadd.s32 %s12, 1
      %s20 = ssub.s32 %s12, %s19
      %p21 = scmp.eq.s32.totalorder %s20, 0
      %s23 = sadd.s32 %s22, 1
      %s24 = scalar_select %p21, %s22, %s23
      %p27 = pneg %p21
      %p28 = scmp.eq.s32.totalorder %s12, 3
      %p29 = por %p27, %p28
      %p30 = scmp.ne.s32.totalorder %s22, %s25
      %p31 = scmp.eq.s32.totalorder %s12, 0
      %p32 = por %p30, %p31
      %p33 = scmp.ne.s32.totalorder %s22, %s25
      %p34 = scmp.eq.s32.totalorder %s17, 3
      %p35 = por %p33, %p34
      %p36 = scmp.ne.s32.totalorder %s25, %s26
      %p37 = scmp.eq.s32.totalorder %s17, 0
      %p38 = por %p36, %p37
      %p39 = scmp.ne.s32.totalorder %s25, %s26
      %p40 = scmp.eq.s32.totalorder %s18, 3
      %p41 = por %p39, %p40
      %p43 = scmp.ne.s32.totalorder %s26, %s42
      %p44 = scmp.eq.s32.totalorder %s18, 0
      %p45 = por %p43, %p44
      %s47 = sadd.s32 %s46, 1
      %p50 = scmp.eq.s32.totalorder %s12, 3
      %p51 = scmp.ne.s32.totalorder %s46, %s48
      %p52 = scmp.eq.s32.totalorder %s12, 0
      %p53 = por %p51, %p52
      %p54 = scmp.ne.s32.totalorder %s46, %s48
      %p55 = scmp.eq.s32.totalorder %s17, 3
      %p56 = por %p54, %p55
      %p57 = scmp.ne.s32.totalorder %s48, %s49
      %p58 = scmp.eq.s32.totalorder %s17, 0
      %p59 = por %p57, %p58
      %p60 = scmp.ne.s32.totalorder %s48, %s49
      %p61 = scmp.eq.s32.totalorder %s18, 3
      %p62 = por %p60, %p61
      %p64 = scmp.ne.s32.totalorder %s49, %s63
      %p65 = scmp.eq.s32.totalorder %s18, 0
      %p66 = por %p64, %p65
      %s68 = sadd.s32 %s67, 1
      %p71 = scmp.eq.s32.totalorder %s12, 3
      %p72 = scmp.ne.s32.totalorder %s67, %s69
      %p73 = scmp.eq.s32.totalorder %s12, 0
      %p74 = por %p72, %p73
      %p75 = scmp.ne.s32.totalorder %s67, %s69
      %p76 = scmp.eq.s32.totalorder %s17, 3
      %p77 = por %p75, %p76
      %p78 = scmp.ne.s32.totalorder %s69, %s70
      %p79 = scmp.eq.s32.totalorder %s17, 0
      %p80 = por %p78, %p79
      %p81 = scmp.ne.s32.totalorder %s69, %s70
      %p82 = scmp.eq.s32.totalorder %s18, 3
      %p83 = por %p81, %p82
      %p85 = scmp.ne.s32.totalorder %s70, %s84
      %p86 = scmp.eq.s32.totalorder %s18, 0
      %p87 = por %p85, %p86
      %s88 = ssub.s32 %s12, %s19
      %p89 = scmp.eq.s32.totalorder %s88, 0
      %s91 = sadd.s32 %s90, 1
      %s92 = scalar_select %p89, %s90, %s91
      %p95 = pneg %p89
      %p96 = scmp.eq.s32.totalorder %s12, 3
      %p97 = por %p95, %p96
      %p98 = scmp.ne.s32.totalorder %s90, %s93
      %p99 = scmp.eq.s32.totalorder %s12, 0
      %p100 = por %p98, %p99
      %p101 = scmp.ne.s32.totalorder %s90, %s93
      %p102 = scmp.eq.s32.totalorder %s17, 3
      %p103 = por %p101, %p102
      %p104 = scmp.ne.s32.totalorder %s93, %s94
      %p105 = scmp.eq.s32.totalorder %s17, 0
      %p106 = por %p104, %p105
      %p107 = scmp.ne.s32.totalorder %s93, %s94
      %p108 = scmp.eq.s32.totalorder %s18, 3
      %p109 = por %p107, %p108
      %p111 = scmp.ne.s32.totalorder %s94, %s110
      %p112 = scmp.eq.s32.totalorder %s18, 0
      %p113 = por %p111, %p112
      %p114 = scmp.le.s32.totalorder 1, %s12
      %p115 = scmp.lt.s32.totalorder %s12, 5
      %p116 = pnand %p114, %p115
      %p117 = pneg %p116
      // Predicated region
      $region9: #{conv_block_cbr.3} parent=5 // pred_check
        _
      $region10: #{conv_block_cbr.3} parent=5 // pred_check_branch
        %119 = sbr.rel (%p116) target = $region12
      $region11: #{conv_block_cbr.3} parent=5 // pred_region
        %s120 = ssub.s32 %s12, 1
        // Predicated region
        $region13: #{conv_block_cbr.3} parent=11 // pred_check
          %p121 = pneg %p59
        $region14: #{conv_block_cbr.3} parent=11 // pred_check_branch
          %123 = sbr.rel (%p121) target = $region16
        $region15: #{conv_block_cbr.3} parent=11 // pred_region
          _
        $region16: #{conv_block_cbr.3} parent=11 // pred_fallthru
          _
        // Predicated region
        $region17: #{conv_block_cbr.3} parent=11 // pred_check
          %p124 = pneg %p80
        $region18: #{conv_block_cbr.3} parent=11 // pred_check_branch
          %126 = sbr.rel (%p124) target = $region20
        $region19: #{conv_block_cbr.3} parent=11 // pred_region
          _
        $region20: #{conv_block_cbr.3} parent=11 // pred_fallthru
          _
      $region12: #{conv_block_cbr.3} parent=5 // pred_fallthru
        _
      %p127 = scmp.lt.s32.totalorder %s12, 4
      // Predicated region
      $region21: #{conv_block_cbr.3} parent=5 // pred_check
        %p128 = pneg %p127
      $region22: #{conv_block_cbr.3} parent=5 // pred_check_branch
        %130 = sbr.rel (%p128) target = $region24
      $region23: #{conv_block_cbr.3} parent=5 // pred_region
        // Predicated region
        $region25: #{conv_block_cbr.3} parent=23 // pred_check
          %p131 = pneg %p32
        $region26: #{conv_block_cbr.3} parent=23 // pred_check_branch
          %133 = sbr.rel (%p131) target = $region28
        $region27: #{conv_block_cbr.3} parent=23 // pred_region
          %s134 = smul.u32 16, %s12
          %p135 = scmp.lt.s32.totalorder %s134, 63
          %s136 = scalar_select %p135, %s134, 63
          %s137 = smul.addr %s136, 8
          %s138 = scalar_lea.vmem %s0, %s137
          %s139 = smul.u32 16, %s12
        $region28: #{conv_block_cbr.3} parent=23 // pred_fallthru
          _
      $region24: #{conv_block_cbr.3} parent=5 // pred_fallthru
        _
      %p140 = scmp.le.s32.totalorder 1, %s12
      %p141 = scmp.lt.s32.totalorder %s12, 5
      %p142 = pnand %p140, %p141
      %p143 = pneg %p142
      // Predicated region
      $region29: #{conv_block_cbr.3} parent=5 // pred_check
        _
      $region30: #{conv_block_cbr.3} parent=5 // pred_check_branch
        %145 = sbr.rel (%p142) target = $region32
      $region31: #{conv_block_cbr.3} parent=5 // pred_region
        %s146 = ssub.s32 %s12, 1
        %s147 = smul.u32 16, %s17
        %p148 = scmp.lt.s32.totalorder %s147, 63
        %s149 = scalar_select %p148, %s147, 63
        %s150 = smul.addr %s149, 8
        %s151 = scalar_lea.vmem %s0, %s150
        %p152 = pneg %p38
        %p153 = pneg %p35
        %p154 = pneg %p59
        %p155 = pneg %p56
        %p156 = pneg %p80
        %p157 = pneg %p77
        %p158 = pneg %p106
        %p159 = pneg %p103
        %s160 = sand.u32 %s93, 1
        %s161 = scalar_lea.sflag [#allocation3], %s160
        %s162 = sand.u32 %s93, 1
        %s163 = smul.addr %s162, 128
        %s164 = scalar_lea.vmem [#allocation2], %s163
        %s165 = smul.u32 16, %s17
        %p166 = scmp.lt.s32.totalorder %s165, 63
        %s167 = scalar_select %p166, %s165, 63
        %s168 = smul.addr %s167, 8
        %s169 = scalar_lea.vmem %s0, %s168
        %s170 = smul.u32 16, %s17
        %s171 = smul.u32 16, %s17
        %v172 = vld [vmem:[%s169] sm:$0xff]
        %v173 = vld [vmem:[%s169 + $0x8] sm:$0xff]
        %v174 = vld [vmem:[%s169 + $0x10] sm:$0xff]
        %v175 = vld [vmem:[%s169 + $0x18] sm:$0xff]
        %v176 = vld [vmem:[%s169 + $0x20] sm:$0xff]
        %v177 = vld [vmem:[%s169 + $0x28] sm:$0xff]
        %v178 = vld [vmem:[%s169 + $0x30] sm:$0xff]
        %v179 = vld [vmem:[%s169 + $0x38] sm:$0xff]
        %v180 = vld [vmem:[%s169 + $0x40] sm:$0xff]
        %v181 = vld [vmem:[%s169 + $0x48] sm:$0xff]
        %v182 = vld [vmem:[%s169 + $0x50] sm:$0xff]
        %v183 = vld [vmem:[%s169 + $0x58] sm:$0xff]
        %v184 = vld [vmem:[%s169 + $0x60] sm:$0xff]
        %v185 = vld [vmem:[%s169 + $0x68] sm:$0xff]
        %v186 = vld [vmem:[%s169 + $0x70] sm:$0xff]
        %v187 = vld [vmem:[%s169 + $0x78] sm:$0xff]
        %v188 = vld [vmem:[%s1] sm:$0x1]
        %v190 = vperm.slane %v188, 0
        %v192 = vmul.f32 %v172, %v190
        %v193 = vmul.f32 %v173, %v190
        %v194 = vmul.f32 %v174, %v190
        %v195 = vmul.f32 %v175, %v190
        %v196 = vmul.f32 %v176, %v190
        %v197 = vmul.f32 %v177, %v190
        %v198 = vmul.f32 %v178, %v190
        %v199 = vmul.f32 %v179, %v190
        %v200 = vmul.f32 %v180, %v190
        %v201 = vmul.f32 %v181, %v190
        %v202 = vmul.f32 %v182, %v190
        %v203 = vmul.f32 %v183, %v190
        %v204 = vmul.f32 %v184, %v190
        %v205 = vmul.f32 %v185, %v190
        %v206 = vmul.f32 %v186, %v190
        %v207 = vmul.f32 %v187, %v190
        %v208 = vld [vmem:[%s2] sm:$0x1]
        %v210 = vperm.slane %v208, 0
        %v212 = vadd.f32 %v192, %v210
        %v213 = vadd.f32 %v193, %v210
        %v214 = vadd.f32 %v194, %v210
        %v215 = vadd.f32 %v195, %v210
        %v216 = vadd.f32 %v196, %v210
        %v217 = vadd.f32 %v197, %v210
        %v218 = vadd.f32 %v198, %v210
        %v219 = vadd.f32 %v199, %v210
        %v220 = vadd.f32 %v200, %v210
        %v221 = vadd.f32 %v201, %v210
        %v222 = vadd.f32 %v202, %v210
        %v223 = vadd.f32 %v203, %v210
        %v224 = vadd.f32 %v204, %v210
        %v225 = vadd.f32 %v205, %v210
        %v226 = vadd.f32 %v206, %v210
        %v227 = vadd.f32 %v207, %v210
        %v228 = vmax.f32 %v212, 0.0
        %v229 = vmax.f32 %v213, 0.0
        %v230 = vmax.f32 %v214, 0.0
        %v231 = vmax.f32 %v215, 0.0
        %v232 = vmax.f32 %v216, 0.0
        %v233 = vmax.f32 %v217, 0.0
        %v234 = vmax.f32 %v218, 0.0
        %v235 = vmax.f32 %v219, 0.0
        %v236 = vmax.f32 %v220, 0.0
        %v237 = vmax.f32 %v221, 0.0
        %v238 = vmax.f32 %v222, 0.0
        %v239 = vmax.f32 %v223, 0.0
        %v240 = vmax.f32 %v224, 0.0
        %v241 = vmax.f32 %v225, 0.0
        %v242 = vmax.f32 %v226, 0.0
        %v243 = vmax.f32 %v227, 0.0
        %244 = vst [vmem:[%s164] sm:$0xff] %v228
        %245 = vst [vmem:[%s164 + $0x8] sm:$0xff] %v229
        %246 = vst [vmem:[%s164 + $0x10] sm:$0xff] %v230
        %247 = vst [vmem:[%s164 + $0x18] sm:$0xff] %v231
        %248 = vst [vmem:[%s164 + $0x20] sm:$0xff] %v232
        %249 = vst [vmem:[%s164 + $0x28] sm:$0xff] %v233
        %250 = vst [vmem:[%s164 + $0x30] sm:$0xff] %v234
        %251 = vst [vmem:[%s164 + $0x38] sm:$0xff] %v235
        %252 = vst [vmem:[%s164 + $0x40] sm:$0xff] %v236
        %253 = vst [vmem:[%s164 + $0x48] sm:$0xff] %v237
        %254 = vst [vmem:[%s164 + $0x50] sm:$0xff] %v238
        %255 = vst [vmem:[%s164 + $0x58] sm:$0xff] %v239
        %256 = vst [vmem:[%s164 + $0x60] sm:$0xff] %v240
        %257 = vst [vmem:[%s164 + $0x68] sm:$0xff] %v241
        %258 = vst [vmem:[%s164 + $0x70] sm:$0xff] %v242
        %259 = vst [vmem:[%s164 + $0x78] sm:$0xff] %v243
        %s260 = sand.u32 %s93, 1
        %s261 = scalar_lea.sflag [#allocation3], %s260
        %s262 = sand.u32 %s93, 1
        %s263 = smul.addr %s262, 128
        %s264 = scalar_lea.vmem [#allocation2], %s263
        // Predicated region
        $region33: #{conv_block_cbr.3} parent=31 // pred_check
          %p265 = pneg %p103
        $region34: #{conv_block_cbr.3} parent=31 // pred_check_branch
          %267 = sbr.rel (%p265) target = $region36
        $region35: #{conv_block_cbr.3} parent=31 // pred_region
          %s268 = smul.u32 16, %s17
          %270 = vsyncadd %s261, 0
          %s271 = smul.addr %s268, 8
          %s272 = scalar_lea.hbm %s3, %s271
          %s273 = sshll.u32 %s264, 4
          %s274 = int_to_ptr.vmem [resolvable:$true] %s273
          %s275 = sshll.u32 %s272, 4
          %s276 = int_to_ptr.hbm [resolvable:$true] %s275
          %281 = dma.vmem_to_hbm [thread:$0]  %s274, 2048, %s276, %s261, 128, 128, 8
        $region36: #{conv_block_cbr.3} parent=31 // pred_fallthru
          _
      $region32: #{conv_block_cbr.3} parent=5 // pred_fallthru
        _
      %p282 = scmp.le.s32.totalorder 2, %s12
      // Predicated region
      $region37: #{conv_block_cbr.3} parent=5 // pred_check
        %p283 = pneg %p282
      $region38: #{conv_block_cbr.3} parent=5 // pred_check_branch
        %285 = sbr.rel (%p283) target = $region40
      $region39: #{conv_block_cbr.3} parent=5 // pred_region
        %s286 = ssub.s32 %s12, 2
        // Predicated region
        $region41: #{conv_block_cbr.3} parent=39 // pred_check
          %p287 = pneg %p109
        $region42: #{conv_block_cbr.3} parent=39 // pred_check_branch
          %289 = sbr.rel (%p287) target = $region44
        $region43: #{conv_block_cbr.3} parent=39 // pred_region
          %s290 = sand.u32 %s94, 1
          %s291 = scalar_lea.sflag [#allocation3], %s290
          %s292 = sand.u32 %s94, 1
          %s293 = smul.addr %s292, 128
          %s294 = scalar_lea.vmem [#allocation2], %s293
          %296 = dma.done %s291, 2048
        $region44: #{conv_block_cbr.3} parent=39 // pred_fallthru
          _
      $region40: #{conv_block_cbr.3} parent=5 // pred_fallthru
        _
    $region6: #{conv_block_cbr.3} parent=1 // loop_footer
      %s16 = sadd.s32 1, %s12
    $region7: #{conv_block_cbr.3} parent=1 // loop_footer_branch
      %11 = sbr.rel target = $region3
    $region8: #{conv_block_cbr.3} parent=1 // loop_exit
      _
    %297 = vsyncpa [#allocation3], 1
    %s298 = scalar_lea.sflag [#allocation3], 1
    %299 = vsyncpa %s298, 1

// kernel: conv_block_cbr.2
$region0: #{conv_block_cbr.2}
  #allocation0 [shape = 'u32[]', space=smem, size = 0x4, offset = 0x4, fixed_abs, tag = 'smem constant byte address 0x4 - core index']
  #allocation1 [shape = 'u32[72,128]{1,0:T(1,128)}', space=vmem, size = 0x9000, scoped, tag = 'internal scratch']
  %s0 = inlined_call_operand.vmem [shape: bf16[512,36], index: 0, kind: input, shape index: {}]
  %s1 = inlined_call_operand.vmem [shape: bf16[36,128], index: 1, kind: input, shape index: {}]
  %s2 = inlined_call_operand.vmem [shape: f32[512,128], index: 2, kind: output, shape index: {0}]
  %s3 = inlined_call_operand.vmem [shape: f32[2,128], index: 3, kind: output, shape index: {1}]
  %4 = xla_tuple %s2, %s3
  %s5 = sld [smem:[#allocation0]]
  $region53: #{conv_block_cbr.2} parent=0
    _
  %s7 = ssub.s32 1, %s5
  %s8 = scalar_select 0, %s7, %s5
  loop: start=0, step=1, limit=6
  $region2: #{conv_block_cbr.2} parent=0 // loop_pre_header
    _
  $region3: #{conv_block_cbr.2} parent=0 // loop_header
    %s10 = sphi 0, %s14
    %p11 = scmp.ge.s32.totalorder %s10, 6
    %s20 = sphi 0, %s22
    %s23 = sphi 0, %s20
    %s24 = sphi 0, %s23
    %s40 = sphi 0, %s24
    %s44 = sphi 0, %s44
    %s46 = sphi 0, %s44
    %s47 = sphi 0, %s46
    %s61 = sphi 0, %s47
    %s67 = sphi 0, %s69
    %s70 = sphi 0, %s67
    %s71 = sphi 0, %s70
    %s87 = sphi 0, %s71
    %s91 = sphi 0, %s91
    %s93 = sphi 0, %s91
    %s94 = sphi 0, %s93
    %s108 = sphi 0, %s94
  $region4: #{conv_block_cbr.2} parent=0 // loop_header_branch
    %13 = sbr.rel (%p11) target = $region8
  $region5: #{conv_block_cbr.2} parent=0 // loop_body
    %s15 = ssub.s32 %s10, 1
    %s16 = ssub.s32 %s10, 2
    %s17 = sadd.s32 %s10, 1
    %s18 = ssub.s32 %s10, %s17
    %p19 = scmp.eq.s32.totalorder %s18, 0
    %s21 = sadd.s32 %s20, 1
    %s22 = scalar_select %p19, %s20, %s21
    %p25 = pneg %p19
    %p26 = scmp.eq.s32.totalorder %s10, 3
    %p27 = por %p25, %p26
    %p28 = scmp.ne.s32.totalorder %s20, %s23
    %p29 = scmp.eq.s32.totalorder %s10, 0
    %p30 = por %p28, %p29
    %p31 = scmp.ne.s32.totalorder %s20, %s23
    %p32 = scmp.eq.s32.totalorder %s15, 3
    %p33 = por %p31, %p32
    %p34 = scmp.ne.s32.totalorder %s23, %s24
    %p35 = scmp.eq.s32.totalorder %s15, 0
    %p36 = por %p34, %p35
    %p37 = scmp.ne.s32.totalorder %s23, %s24
    %p38 = scmp.eq.s32.totalorder %s16, 3
    %p39 = por %p37, %p38
    %p41 = scmp.ne.s32.totalorder %s24, %s40
    %p42 = scmp.eq.s32.totalorder %s16, 0
    %p43 = por %p41, %p42
    %s45 = sadd.s32 %s44, 1
    %p48 = scmp.eq.s32.totalorder %s10, 3
    %p49 = scmp.ne.s32.totalorder %s44, %s46
    %p50 = scmp.eq.s32.totalorder %s10, 0
    %p51 = por %p49, %p50
    %p52 = scmp.ne.s32.totalorder %s44, %s46
    %p53 = scmp.eq.s32.totalorder %s15, 3
    %p54 = por %p52, %p53
    %p55 = scmp.ne.s32.totalorder %s46, %s47
    %p56 = scmp.eq.s32.totalorder %s15, 0
    %p57 = por %p55, %p56
    %p58 = scmp.ne.s32.totalorder %s46, %s47
    %p59 = scmp.eq.s32.totalorder %s16, 3
    %p60 = por %p58, %p59
    %p62 = scmp.ne.s32.totalorder %s47, %s61
    %p63 = scmp.eq.s32.totalorder %s16, 0
    %p64 = por %p62, %p63
    %s65 = ssub.s32 %s10, %s17
    %p66 = scmp.eq.s32.totalorder %s65, 0
    %s68 = sadd.s32 %s67, 1
    %s69 = scalar_select %p66, %s67, %s68
    %p72 = pneg %p66
    %p73 = scmp.eq.s32.totalorder %s10, 3
    %p74 = por %p72, %p73
    %p75 = scmp.ne.s32.totalorder %s67, %s70
    %p76 = scmp.eq.s32.totalorder %s10, 0
    %p77 = por %p75, %p76
    %p78 = scmp.ne.s32.totalorder %s67, %s70
    %p79 = scmp.eq.s32.totalorder %s15, 3
    %p80 = por %p78, %p79
    %p81 = scmp.ne.s32.totalorder %s70, %s71
    %p82 = scmp.eq.s32.totalorder %s15, 0
    %p83 = por %p81, %p82
    %p84 = scmp.ne.s32.totalorder %s70, %s71
    %p85 = scmp.eq.s32.totalorder %s16, 3
    %p86 = por %p84, %p85
    %p88 = scmp.ne.s32.totalorder %s71, %s87
    %p89 = scmp.eq.s32.totalorder %s16, 0
    %p90 = por %p88, %p89
    %s92 = sadd.s32 %s91, 1
    %p95 = scmp.eq.s32.totalorder %s10, 3
    %p96 = scmp.ne.s32.totalorder %s91, %s93
    %p97 = scmp.eq.s32.totalorder %s10, 0
    %p98 = por %p96, %p97
    %p99 = scmp.ne.s32.totalorder %s91, %s93
    %p100 = scmp.eq.s32.totalorder %s15, 3
    %p101 = por %p99, %p100
    %p102 = scmp.ne.s32.totalorder %s93, %s94
    %p103 = scmp.eq.s32.totalorder %s15, 0
    %p104 = por %p102, %p103
    %p105 = scmp.ne.s32.totalorder %s93, %s94
    %p106 = scmp.eq.s32.totalorder %s16, 3
    %p107 = por %p105, %p106
    %p109 = scmp.ne.s32.totalorder %s94, %s108
    %p110 = scmp.eq.s32.totalorder %s16, 0
    %p111 = por %p109, %p110
    %p112 = scmp.le.s32.totalorder 1, %s10
    %p113 = scmp.lt.s32.totalorder %s10, 5
    %p114 = pnand %p112, %p113
    %p115 = pneg %p114
    // Predicated region
    $region9: #{conv_block_cbr.2} parent=5 // pred_check
      _
    $region10: #{conv_block_cbr.2} parent=5 // pred_check_branch
      %117 = sbr.rel (%p114) target = $region12
    $region11: #{conv_block_cbr.2} parent=5 // pred_region
      %s118 = ssub.s32 %s10, 1
      // Predicated region
      $region13: #{conv_block_cbr.2} parent=11 // pred_check
        %p119 = pneg %p57
      $region14: #{conv_block_cbr.2} parent=11 // pred_check_branch
        %121 = sbr.rel (%p119) target = $region16
      $region15: #{conv_block_cbr.2} parent=11 // pred_region
        _
      $region16: #{conv_block_cbr.2} parent=11 // pred_fallthru
        _
    $region12: #{conv_block_cbr.2} parent=5 // pred_fallthru
      _
    %p122 = scmp.lt.s32.totalorder %s10, 4
    // Predicated region
    $region17: #{conv_block_cbr.2} parent=5 // pred_check
      %p123 = pneg %p122
    $region18: #{conv_block_cbr.2} parent=5 // pred_check_branch
      %125 = sbr.rel (%p123) target = $region20
    $region19: #{conv_block_cbr.2} parent=5 // pred_region
      // Predicated region
      $region21: #{conv_block_cbr.2} parent=19 // pred_check
        %p126 = pneg %p30
      $region22: #{conv_block_cbr.2} parent=19 // pred_check_branch
        %128 = sbr.rel (%p126) target = $region24
      $region23: #{conv_block_cbr.2} parent=19 // pred_region
        %s129 = smul.u32 16, %s10
        %p130 = scmp.lt.s32.totalorder %s129, 63
        %s131 = scalar_select %p130, %s129, 63
        %s132 = smul.addr %s131, 4
        %s133 = scalar_lea.vmem %s0, %s132
        %s134 = smul.u32 16, %s10
      $region24: #{conv_block_cbr.2} parent=19 // pred_fallthru
        _
    $region20: #{conv_block_cbr.2} parent=5 // pred_fallthru
      _
    %p135 = scmp.le.s32.totalorder 1, %s10
    %p136 = scmp.lt.s32.totalorder %s10, 5
    %p137 = pnand %p135, %p136
    %p138 = pneg %p137
    // Predicated region
    $region25: #{conv_block_cbr.2} parent=5 // pred_check
      _
    $region26: #{conv_block_cbr.2} parent=5 // pred_check_branch
      %140 = sbr.rel (%p137) target = $region28
    $region27: #{conv_block_cbr.2} parent=5 // pred_region
      %s141 = ssub.s32 %s10, 1
      %s142 = smul.u32 16, %s15
      %p143 = scmp.lt.s32.totalorder %s142, 63
      %s144 = scalar_select %p143, %s142, 63
      %s145 = smul.addr %s144, 4
      %s146 = scalar_lea.vmem %s0, %s145
      %p147 = pneg %p36
      %p148 = pneg %p33
      %p149 = pneg %p57
      %p150 = pneg %p54
      %p151 = pneg %p83
      %p152 = pneg %p80
      %s153 = smul.u32 16, %s15
      %p154 = scmp.lt.s32.totalorder %s153, 63
      %s155 = scalar_select %p154, %s153, 63
      %s156 = smul.addr %s155, 8
      %s157 = scalar_lea.vmem %s2, %s156
      %p158 = pneg %p104
      %p159 = pneg %p101
      %s160 = smul.u32 16, %s15
      %p161 = scmp.lt.s32.totalorder %s160, 63
      %s162 = scalar_select %p161, %s160, 63
      %s163 = smul.addr %s162, 4
      %s164 = scalar_lea.vmem %s0, %s163
      %s165 = smul.u32 16, %s15
      %s166 = smul.u32 16, %s15
      %p167 = scmp.lt.s32.totalorder %s166, 63
      %s168 = scalar_select %p167, %s166, 63
      %s169 = smul.addr %s168, 8
      %s170 = scalar_lea.vmem %s2, %s169
      %s171 = smul.u32 16, %s15
      %v173 = vld [vmem:[%s164] sm:$0xf]
      %v174 = vld [vmem:[%s164 + $0x4] sm:$0xf]
      %v175 = vld [vmem:[%s164 + $0x8] sm:$0xf]
      %v176 = vld [vmem:[%s164 + $0xc] sm:$0xf]
      %v177 = vld [vmem:[%s164 + $0x10] sm:$0xf]
      %v178 = vld [vmem:[%s164 + $0x14] sm:$0xf]
      %v179 = vld [vmem:[%s164 + $0x18] sm:$0xf]
      %v180 = vld [vmem:[%s164 + $0x1c] sm:$0xf]
      %v181 = vld [vmem:[%s164 + $0x20] sm:$0xf]
      %v182 = vld [vmem:[%s164 + $0x24] sm:$0xf]
      %v183 = vld [vmem:[%s164 + $0x28] sm:$0xf]
      %v184 = vld [vmem:[%s164 + $0x2c] sm:$0xf]
      %v185 = vld [vmem:[%s164 + $0x30] sm:$0xf]
      %v186 = vld [vmem:[%s164 + $0x34] sm:$0xf]
      %v187 = vld [vmem:[%s164 + $0x38] sm:$0xf]
      %v188 = vld [vmem:[%s164 + $0x3c] sm:$0xf]
      %v189 = vld [vmem:[%s1] sm:$0xf]
      %v190 = vld [vmem:[%s1 + $0x4] sm:$0xf]
      %v191 = vld [vmem:[%s1 + $0x8] sm:$0xf]
      %v192 = vld [vmem:[%s1 + $0xc] sm:$0xf]
      %v193 = vld [vmem:[%s1 + $0x10] sm:$0x3]
      %v210 = vunpack.c.l.b16 %v173
      %v211 = vunpack.c.l.b16 %v174
      %v212 = vunpack.c.l.b16 %v175
      %v213 = vunpack.c.l.b16 %v176
      %v214 = vunpack.c.l.b16 %v177
      %v215 = vunpack.c.l.b16 %v178
      %v216 = vunpack.c.l.b16 %v179
      %v217 = vunpack.c.l.b16 %v180
      %v218 = vunpack.c.l.b16 %v181
      %v219 = vunpack.c.l.b16 %v182
      %v220 = vunpack.c.l.b16 %v183
      %v221 = vunpack.c.l.b16 %v184
      %v222 = vunpack.c.l.b16 %v185
      %v223 = vunpack.c.l.b16 %v186
      %v224 = vunpack.c.l.b16 %v187
      %v225 = vunpack.c.l.b16 %v188
      %v226 = vpack.c.b16 %v211, %v210
      %v227 = vpack.c.b16 %v213, %v212
      %v228 = vpack.c.b16 %v215, %v214
      %v229 = vpack.c.b16 %v217, %v216
      %v230 = vpack.c.b16 %v219, %v218
      %v231 = vpack.c.b16 %v221, %v220
      %v232 = vpack.c.b16 %v223, %v222
      %v233 = vpack.c.b16 %v225, %v224
      %v239 = vunpack.c.l.b16 %v189
      %v240 = vunpack.c.l.b16 %v190
      %v241 = vunpack.c.l.b16 %v191
      %v242 = vunpack.c.l.b16 %v192
      %v243 = vunpack.c.l.b16 %v193
      %v244 = vpack.c.b16 %v240, %v239
      %v245 = vpack.c.b16 %v242, %v241
      %v246 = vpack.c.b16 %v243, %v243
      %vm249 = vcmask 293888
      %v251 = vsel %vm249, %v226, 0
      %v254 = vsel %vm249, %v227, 0
      %v257 = vsel %vm249, %v228, 0
      %v260 = vsel %vm249, %v229, 0
      %v263 = vsel %vm249, %v230, 0
      %v266 = vsel %vm249, %v231, 0
      %v269 = vsel %vm249, %v232, 0
      %v272 = vsel %vm249, %v233, 0
      %vm274 = vcmask 1041408
      %v276 = vsel %vm274, %v246, 0
      %278 = vmatpush.bf16.msra.mxu0 0
      %279 = vmatpush.bf16.msra.mxu0 0
      %280 = vmatpush.bf16.msra.mxu0 0
      %281 = vmatpush.bf16.msra.mxu0 0
      %282 = vmatpush.bf16.msra.mxu0 0
      %283 = vmatpush.bf16.msra.mxu0 %v276
      %284 = vmatpush.bf16.msra.mxu0 %v245
      %285 = vmatpush.bf16.msra.mxu0 %v244
      %286 = vmatmul.bf16.gmra.mxu0 %v251
      %v287 = vpop.f32.mrf.mxu0
      %v288 = vadd.f32 0.0, %v287
      %v289 = vpop.f32.mrf.mxu0
      %v290 = vadd.f32 0.0, %v289
      %291 = vmatmul.bf16.gmra.mxu0 %v254
      %v292 = vpop.f32.mrf.mxu0
      %v293 = vadd.f32 0.0, %v292
      %v294 = vpop.f32.mrf.mxu0
      %v295 = vadd.f32 0.0, %v294
      %296 = vmatmul.bf16.gmra.mxu0 %v257
      %v297 = vpop.f32.mrf.mxu0
      %v298 = vadd.f32 0.0, %v297
      %v299 = vpop.f32.mrf.mxu0
      %v300 = vadd.f32 0.0, %v299
      %301 = vmatmul.bf16.gmra.mxu0 %v260
      %v302 = vpop.f32.mrf.mxu0
      %v303 = vadd.f32 0.0, %v302
      %v304 = vpop.f32.mrf.mxu0
      %v305 = vadd.f32 0.0, %v304
      %306 = vmatmul.bf16.gmra.mxu0 %v263
      %v307 = vpop.f32.mrf.mxu0
      %v308 = vadd.f32 0.0, %v307
      %v309 = vpop.f32.mrf.mxu0
      %v310 = vadd.f32 0.0, %v309
      %311 = vmatmul.bf16.gmra.mxu0 %v266
      %v312 = vpop.f32.mrf.mxu0
      %v313 = vadd.f32 0.0, %v312
      %v314 = vpop.f32.mrf.mxu0
      %v315 = vadd.f32 0.0, %v314
      %316 = vmatmul.bf16.gmra.mxu0 %v269
      %v317 = vpop.f32.mrf.mxu0
      %v318 = vadd.f32 0.0, %v317
      %v319 = vpop.f32.mrf.mxu0
      %v320 = vadd.f32 0.0, %v319
      %321 = vmatmul.bf16.gmra.mxu0 %v272
      %v322 = vpop.f32.mrf.mxu0
      %v323 = vadd.f32 0.0, %v322
      %v324 = vpop.f32.mrf.mxu0
      %v325 = vadd.f32 0.0, %v324
      %326 = vdwg.mxu0
      %327 = vst [vmem:[%s170] sm:$0xff] %v288
      %328 = vst [vmem:[%s170 + $0x8] sm:$0xff] %v290
      %329 = vst [vmem:[%s170 + $0x10] sm:$0xff] %v293
      %330 = vst [vmem:[%s170 + $0x18] sm:$0xff] %v295
      %331 = vst [vmem:[%s170 + $0x20] sm:$0xff] %v298
      %332 = vst [vmem:[%s170 + $0x28] sm:$0xff] %v300
      %333 = vst [vmem:[%s170 + $0x30] sm:$0xff] %v303
      %334 = vst [vmem:[%s170 + $0x38] sm:$0xff] %v305
      %335 = vst [vmem:[%s170 + $0x40] sm:$0xff] %v308
      %336 = vst [vmem:[%s170 + $0x48] sm:$0xff] %v310
      %337 = vst [vmem:[%s170 + $0x50] sm:$0xff] %v313
      %338 = vst [vmem:[%s170 + $0x58] sm:$0xff] %v315
      %339 = vst [vmem:[%s170 + $0x60] sm:$0xff] %v318
      %340 = vst [vmem:[%s170 + $0x68] sm:$0xff] %v320
      %341 = vst [vmem:[%s170 + $0x70] sm:$0xff] %v323
      %342 = vst [vmem:[%s170 + $0x78] sm:$0xff] %v325
      %p343 = scmp.eq.s32.totalorder %s15, 0
      // Predicated region
      $region29: #{conv_block_cbr.2} parent=27 // pred_check
        %p344 = pneg %p343
      $region30: #{conv_block_cbr.2} parent=27 // pred_check_branch
        %346 = sbr.rel (%p344) target = $region32
      $region31: #{conv_block_cbr.2} parent=27 // pred_region
        %347 = vst [vmem:[%s3] sm:$0x3] 0.0
      $region32: #{conv_block_cbr.2} parent=27 // pred_fallthru
        _
      %v348 = vadd.f32 %v288, %v290
      %v349 = vadd.f32 %v348, %v293
      %v350 = vadd.f32 %v349, %v295
      %v351 = vadd.f32 %v350, %v298
      %v352 = vadd.f32 %v351, %v300
      %v353 = vadd.f32 %v352, %v303
      %v354 = vadd.f32 %v353, %v305
      %v355 = vadd.f32 %v354, %v308
      %v356 = vadd.f32 %v355, %v310
      %v357 = vadd.f32 %v356, %v313
      %v358 = vadd.f32 %v357, %v315
      %v359 = vadd.f32 %v358, %v318
      %v360 = vadd.f32 %v359, %v320
      %v361 = vadd.f32 %v360, %v323
      %v362 = vadd.f32 %v361, %v325
      %v363 = vrot.slane %v362, 4
      %v364 = vadd.f32 %v362, %v363
      %v365 = vrot.slane %v364, 2
      %v366 = vadd.f32 %v364, %v365
      %v367 = vrot.slane %v366, 1
      %v368 = vadd.f32 %v366, %v367
      %v369 = vmul.f32 %v288, %v288
      %v370 = vmul.f32 %v290, %v290
      %v371 = vmul.f32 %v293, %v293
      %v372 = vmul.f32 %v295, %v295
      %v373 = vmul.f32 %v298, %v298
      %v374 = vmul.f32 %v300, %v300
      %v375 = vmul.f32 %v303, %v303
      %v376 = vmul.f32 %v305, %v305
      %v377 = vmul.f32 %v308, %v308
      %v378 = vmul.f32 %v310, %v310
      %v379 = vmul.f32 %v313, %v313
      %v380 = vmul.f32 %v315, %v315
      %v381 = vmul.f32 %v318, %v318
      %v382 = vmul.f32 %v320, %v320
      %v383 = vmul.f32 %v323, %v323
      %v384 = vmul.f32 %v325, %v325
      %v385 = vadd.f32 %v369, %v370
      %v386 = vadd.f32 %v385, %v371
      %v387 = vadd.f32 %v386, %v372
      %v388 = vadd.f32 %v387, %v373
      %v389 = vadd.f32 %v388, %v374
      %v390 = vadd.f32 %v389, %v375
      %v391 = vadd.f32 %v390, %v376
      %v392 = vadd.f32 %v391, %v377
      %v393 = vadd.f32 %v392, %v378
      %v394 = vadd.f32 %v393, %v379
      %v395 = vadd.f32 %v394, %v380
      %v396 = vadd.f32 %v395, %v381
      %v397 = vadd.f32 %v396, %v382
      %v398 = vadd.f32 %v397, %v383
      %v399 = vadd.f32 %v398, %v384
      %v400 = vrot.slane %v399, 4
      %v401 = vadd.f32 %v399, %v400
      %v402 = vrot.slane %v401, 2
      %v403 = vadd.f32 %v401, %v402
      %v404 = vrot.slane %v403, 1
      %v405 = vadd.f32 %v403, %v404
      %v406 = vld [vmem:[%s3] sm:$0x3]
      %vm407 = vcmask 1040384
      %v408 = vsel %vm407, %v368, %v405
      %v409 = vadd.f32 %v406, %v408
      %410 = vst [vmem:[%s3] sm:$0x3] %v409
      %s411 = smul.u32 16, %s15
      %p412 = scmp.lt.s32.totalorder %s411, 63
      %s413 = scalar_select %p412, %s411, 63
      %s414 = smul.addr %s413, 8
      %s415 = scalar_lea.vmem %s2, %s414
      // Predicated region
      $region33: #{conv_block_cbr.2} parent=27 // pred_check
        %p416 = pneg %p80
      $region34: #{conv_block_cbr.2} parent=27 // pred_check_branch
        %418 = sbr.rel (%p416) target = $region36
      $region35: #{conv_block_cbr.2} parent=27 // pred_region
        %s419 = smul.u32 16, %s15
      $region36: #{conv_block_cbr.2} parent=27 // pred_fallthru
        _
      // Predicated region
      $region37: #{conv_block_cbr.2} parent=27 // pred_check
        %p420 = pneg %p101
      $region38: #{conv_block_cbr.2} parent=27 // pred_check_branch
        %422 = sbr.rel (%p420) target = $region40
      $region39: #{conv_block_cbr.2} parent=27 // pred_region
        _
      $region40: #{conv_block_cbr.2} parent=27 // pred_fallthru
        _
      // Predicated region
      $region41: #{conv_block_cbr.2} parent=27 // pred_check
        %p423 = pneg %p101
      $region42: #{conv_block_cbr.2} parent=27 // pred_check_branch
        %425 = sbr.rel (%p423) target = $region44
      $region43: #{conv_block_cbr.2} parent=27 // pred_region
        _
      $region44: #{conv_block_cbr.2} parent=27 // pred_fallthru
        _
    $region28: #{conv_block_cbr.2} parent=5 // pred_fallthru
      _
    %p426 = scmp.le.s32.totalorder 2, %s10
    // Predicated region
    $region45: #{conv_block_cbr.2} parent=5 // pred_check
      %p427 = pneg %p426
    $region46: #{conv_block_cbr.2} parent=5 // pred_check_branch
      %429 = sbr.rel (%p427) target = $region48
    $region47: #{conv_block_cbr.2} parent=5 // pred_region
      %s430 = ssub.s32 %s10, 2
      // Predicated region
      $region49: #{conv_block_cbr.2} parent=47 // pred_check
        %p431 = pneg %p86
      $region50: #{conv_block_cbr.2} parent=47 // pred_check_branch
        %433 = sbr.rel (%p431) target = $region52
      $region51: #{conv_block_cbr.2} parent=47 // pred_region
        %s434 = smul.u32 16, %s16
        %p435 = scmp.lt.s32.totalorder %s434, 63
        %s436 = scalar_select %p435, %s434, 63
        %s437 = smul.addr %s436, 8
        %s438 = scalar_lea.vmem %s2, %s437
      $region52: #{conv_block_cbr.2} parent=47 // pred_fallthru
        _
    $region48: #{conv_block_cbr.2} parent=5 // pred_fallthru
      _
  $region6: #{conv_block_cbr.2} parent=0 // loop_footer
    %s14 = sadd.s32 1, %s10
  $region7: #{conv_block_cbr.2} parent=0 // loop_footer_branch
    %9 = sbr.rel target = $region3
  $region8: #{conv_block_cbr.2} parent=0 // loop_exit
    _

</llo_original>
